<compile_context>
chip_gen: v7x
topology: tpu7x:2x2x1
jax: 0.10.0
libtpu: 0.0.40
codegen_flags: <defaults>
</compile_context>

<pallas_src>
import functools
import math

import jax
import jax.numpy as jnp
from jax import lax
from jax.experimental import pallas as pl
from jax.experimental.pallas import tpu as pltpu


# Combined (output + lane-padded input) VMEM bytes per block buffer (double-buffered
# by the BlockSpec pipeline).  ~4 MiB of output per block on the folded path.
_BLOCK_BUDGET_BYTES = 8 * 1024 * 1024
# In-kernel row sub-tile size: bounds the vector temporaries Mosaic materialises.
_SUB_TILE_BYTES = 512 * 1024
# Scoped-VMEM limit: above v5e's 16 MiB default, below every generation's physical
# VMEM (128 / 128 / 64 MiB) and within v7x's 32 MiB default.
_VMEM_LIMIT_BYTES = 32 * 1024 * 1024
# Max VALU ops per written f32 element that still hide under the HBM write roofline
# (v6e-ish); used to decide folded vs general path for small class counts.
_FOLD_VALU_BUDGET = 12


def _round_up(v: int, m: int) -> int:
    return ((v + m - 1) // m) * m


def _pick_tiles(rows: int, row_bytes: int) -> tuple[int, int]:
    """Pick (block rows `tm`, in-kernel sub-tile rows `sub`) with `sub` dividing `tm`.

    `row_bytes` is the VMEM bytes per row of (output block + lane-padded input block).
    """
    if rows <= 8:
        return rows, rows
    rows_pad = _round_up(rows, 8)
    sub = max(8, min(_SUB_TILE_BYTES // row_bytes, 1024) // 8 * 8)
    if sub >= rows_pad:
        return rows_pad, rows_pad
    k_budget = max(1, _BLOCK_BUDGET_BYTES // (sub * row_bytes))
    # Keep >= 2 grid steps along the (parallel) row axis so v7x megacore can split it.
    k_steps = max(1, rows_pad // (2 * sub))
    k = min(k_budget, k_steps)
    return sub * k, sub


def _for_each_row_subtile(tm: int, sub: int, emit) -> None:
    """Run emit(row_offset) over the block's row sub-tiles (bounds temp live ranges)."""
    n_sub = tm // sub
    if n_sub <= 1:
        emit(0)
        return

    def body(t, carry):
        emit(pl.multiple_of(t * sub, 8))   # dynamic sublane offset, 8-aligned
        return carry

    lax.fori_loop(0, n_sub, body, 0)


def _one_hot_folded_kernel(sub, r, c, x_ref, o_ref):
    # x_ref: (TM, r) int32 -- r consecutive flattened indices per folded row.
    # o_ref: (TM, r*c) f32 -- lane-dense (multiple of 128 lanes) folded one-hot rows.
    tm, lane = o_ref.shape
    # Hoisted: lane iota reused by every sub-tile and every fold step.
    col = lax.broadcasted_iota(jnp.int32, (sub, lane), 1)

    def emit(off):
        xb = x_ref[pl.ds(off, sub), :]                          # (sub, r)
        acc = None
        for s in range(r):                                      # static unroll, r <= 64
            xs = xb[:, s:s + 1]                                 # (sub, 1)
            # Mask out-of-range / negative indices per row so they never set a bit
            # (in particular never inside a *neighbouring* sub-row's lane range).
            tgt = jnp.where((xs >= 0) & (xs < c), xs + s * c, -1)
            hit = col == tgt                                    # (sub, lane) bool
            acc = hit if acc is None else (acc | hit)           # bool-OR accumulate
        o_ref[pl.ds(off, sub), :] = acc.astype(jnp.float32)     # single final cast

    _for_each_row_subtile(tm, sub, emit)


def _one_hot_tiled_kernel(sub, x_ref, o_ref):
    # x_ref: (TM, 1) int32; o_ref: (TM, TC) f32 covering classes [j*TC, (j+1)*TC).
    tm, tc = o_ref.shape
    j = pl.program_id(1)
    col = lax.broadcasted_iota(jnp.int32, (sub, tc), 1)         # hoisted out of the loop

    def emit(off):
        # Shift the cheap (sub, 1) per-row target instead of the full (sub, tc) iota.
        tgt = x_ref[pl.ds(off, sub), :] - j * tc                # (sub, 1)
        o_ref[pl.ds(off, sub), :] = (col == tgt).astype(jnp.float32)

    _for_each_row_subtile(tm, sub, emit)


def one_hot(x: jax.Array, num_classes: int) -> jax.Array:
    """One-hot encode integer tensor `x` into float32, class dim last."""
    if num_classes <= 0:
        # TODO(synk): num_classes=-1 ("infer from data") needs a data-dependent output
        # shape, impossible under JAX static shapes; it must be given explicitly.
        raise ValueError("num_classes must be given explicitly (static shapes).")

    orig_shape = x.shape
    n = int(math.prod(orig_shape)) if orig_shape else 1
    c = int(num_classes)
    if n == 0:
        return jnp.zeros((*orig_shape, c), jnp.float32)

    cost = pl.CostEstimate(
        flops=n * c, transcendentals=0, bytes_accessed=n * c * 4 + n * 4
    )

    # ---- Lane-dense folded path for small C -------------------------------------
    # gcd(c, 128) is a power of two, so r is too and lane = r*c is a multiple of 128.
    r = 128 // math.gcd(c, 128)
    lane = r * c
    if (c < 128 and r <= 64 and n % r == 0
            and (2 * r + 1) * c <= _FOLD_VALU_BUDGET * 128):
        rows = n // r
        x_fold = x.reshape(rows, r).astype(jnp.int32)
        # +128 lanes: the (tm, r) int32 input block is lane-padded to 128 in VMEM.
        tm, sub = _pick_tiles(rows, (lane + 128) * 4)
        out = pl.pallas_call(
            functools.partial(_one_hot_folded_kernel, sub, r, c),
            out_shape=jax.ShapeDtypeStruct((rows, lane), jnp.float32),
            grid_spec=pltpu.PrefetchScalarGridSpec(
                num_scalar_prefetch=0,
                grid=(pl.cdiv(rows, tm),),
                in_specs=[pl.BlockSpec((tm, r), lambda i: (i, 0))],
                out_specs=pl.BlockSpec((tm, lane), lambda i: (i, 0)),
            ),
            compiler_params=pltpu.CompilerParams(
                dimension_semantics=("parallel",),
                vmem_limit_bytes=_VMEM_LIMIT_BYTES,
            ),
            cost_estimate=cost,
        )(x_fold)
        return out.reshape(*orig_shape, c)

    # ---- General path: rows x (optionally tiled) classes ------------------------
    x_flat = x.reshape(n, 1).astype(jnp.int32)
    tc = c if c <= 2048 else 2048          # class tile: full C, or 2048 (mult of 128)
    tc_pad = _round_up(tc, 128)            # VMEM lane padding of the output block
    tm, sub = _pick_tiles(n, (tc_pad + 128) * 4)
    out = pl.pallas_call(
        functools.partial(_one_hot_tiled_kernel, sub),
        out_shape=jax.ShapeDtypeStruct((n, c), jnp.float32),
        grid_spec=pltpu.PrefetchScalarGridSpec(
            num_scalar_prefetch=0,
            # Class axis innermost: the (tm, 1) index block is reused without re-DMA.
            grid=(pl.cdiv(n, tm), pl.cdiv(c, tc)),
            in_specs=[pl.BlockSpec((tm, 1), lambda i, j: (i, 0))],
            out_specs=pl.BlockSpec((tm, tc), lambda i, j: (i, j)),
        ),
        compiler_params=pltpu.CompilerParams(
            dimension_semantics=("parallel", "parallel"),
            vmem_limit_bytes=_VMEM_LIMIT_BYTES,
        ),
        cost_estimate=cost,
    )(x_flat)
    return out.reshape(*orig_shape, c)


if __name__ == "__main__":
    key = jax.random.PRNGKey(0)

    checks = [
        ((2, 8), 32),       # folded path (r=4), single block
        ((4, 32), 2),       # folded path with a large fold factor (r=64)
        ((20, 1000), 32),   # folded path: multi-step grid, strip loop, partial edge block
        ((3, 5), 10),       # general path (n not divisible by fold factor), partial block
        ((2, 3), 2200),     # general path: 2-D grid over classes, partial class block
    ]
    for shape, num_classes in checks:
        key, sub_key = jax.random.split(key)
        x = jax.random.randint(
            sub_key, shape, minval=0, maxval=num_classes, dtype=jnp.int32
        )
        y = jax.block_until_ready(one_hot(x, num_classes))
        y_ref = jax.nn.one_hot(x, num_classes, dtype=jnp.float32)
        assert y.shape == (*shape, num_classes), (shape, num_classes)
        assert y.dtype == jnp.float32
        assert bool(jnp.all(y == y_ref)), (shape, num_classes)

    # Out-of-range / negative indices -> all-zero rows (matches jax.nn.one_hot); in
    # particular the folded path must not set a bit in a neighbouring row.
    x_bad = jnp.array([[0, 33, 31, -1], [5, 7, 40, 2]], dtype=jnp.int32)
    y = jax.block_until_ready(one_hot(x_bad, 32))
    y_ref = jax.nn.one_hot(x_bad, 32, dtype=jnp.float32)
    assert bool(jnp.all(y == y_ref))

    print("KERNEL_OK")
</pallas_src>

<mosaic_0001>
module attributes {stable_mosaic.version = 11 : i64} {
  func.func @_one_hot_folded_kernel(%arg0: i32, %arg1: memref<4x4xi32, #tpu.memory_space<vmem>>, %arg2: memref<4x128xf32, #tpu.memory_space<vmem>>) attributes {dimension_semantics = [#tpu.dimension_semantics<parallel>], iteration_bounds = array<i64: 1>, scalar_prefetch = 0 : i64, scratch_operands = 0 : i64, tpu.core_type = #tpu.core_type<tc>, window_params = [{transform_indices = @transform_0, window_bounds = array<i64: 4, 4>}, {transform_indices = @transform_1, window_bounds = array<i64: 4, 128>}]} {
    %0 = tpu.iota {dimensions = array<i32: 1>} : vector<4x128xi32>
    %c0 = arith.constant 0 : index
    %c0_0 = arith.constant 0 : index
    %1 = vector.load %arg1[%c0, %c0_0] : memref<4x4xi32, #tpu.memory_space<vmem>>, vector<4x4xi32>
    %2 = vector.extract_strided_slice %1 {offsets = [0, 0], sizes = [4, 1], strides = [1, 1]} : vector<4x4xi32> to vector<4x1xi32>
    %c0_i32 = arith.constant 0 : i32
    %3 = vector.broadcast %c0_i32 : i32 to vector<4x1xi32>
    %4 = arith.cmpi sge, %2, %3 : vector<4x1xi32>
    %c32_i32 = arith.constant 32 : i32
    %5 = vector.broadcast %c32_i32 : i32 to vector<4x1xi32>
    %6 = arith.cmpi slt, %2, %5 : vector<4x1xi32>
    %7 = arith.andi %4, %6 : vector<4x1xi1>
    %c0_i32_1 = arith.constant 0 : i32
    %8 = vector.broadcast %c0_i32_1 : i32 to vector<4x1xi32>
    %9 = arith.addi %2, %8 : vector<4x1xi32>
    %c-1_i32 = arith.constant -1 : i32
    %10 = vector.broadcast %c-1_i32 : i32 to vector<4x1xi32>
    %11 = arith.select %7, %9, %10 : vector<4x1xi1>, vector<4x1xi32>
    %12 = vector.broadcast %11 : vector<4x1xi32> to vector<4x128xi32>
    %13 = arith.cmpi eq, %0, %12 : vector<4x128xi32>
    %14 = vector.extract_strided_slice %1 {offsets = [0, 1], sizes = [4, 1], strides = [1, 1]} : vector<4x4xi32> to vector<4x1xi32>
    %c0_i32_2 = arith.constant 0 : i32
    %15 = vector.broadcast %c0_i32_2 : i32 to vector<4x1xi32>
    %16 = arith.cmpi sge, %14, %15 : vector<4x1xi32>
    %c32_i32_3 = arith.constant 32 : i32
    %17 = vector.broadcast %c32_i32_3 : i32 to vector<4x1xi32>
    %18 = arith.cmpi slt, %14, %17 : vector<4x1xi32>
    %19 = arith.andi %16, %18 : vector<4x1xi1>
    %c32_i32_4 = arith.constant 32 : i32
    %20 = vector.broadcast %c32_i32_4 : i32 to vector<4x1xi32>
    %21 = arith.addi %14, %20 : vector<4x1xi32>
    %c-1_i32_5 = arith.constant -1 : i32
    %22 = vector.broadcast %c-1_i32_5 : i32 to vector<4x1xi32>
    %23 = arith.select %19, %21, %22 : vector<4x1xi1>, vector<4x1xi32>
    %24 = vector.broadcast %23 : vector<4x1xi32> to vector<4x128xi32>
    %25 = arith.cmpi eq, %0, %24 : vector<4x128xi32>
    %26 = arith.ori %13, %25 : vector<4x128xi1>
    %27 = vector.extract_strided_slice %1 {offsets = [0, 2], sizes = [4, 1], strides = [1, 1]} : vector<4x4xi32> to vector<4x1xi32>
    %c0_i32_6 = arith.constant 0 : i32
    %28 = vector.broadcast %c0_i32_6 : i32 to vector<4x1xi32>
    %29 = arith.cmpi sge, %27, %28 : vector<4x1xi32>
    %c32_i32_7 = arith.constant 32 : i32
    %30 = vector.broadcast %c32_i32_7 : i32 to vector<4x1xi32>
    %31 = arith.cmpi slt, %27, %30 : vector<4x1xi32>
    %32 = arith.andi %29, %31 : vector<4x1xi1>
    %c64_i32 = arith.constant 64 : i32
    %33 = vector.broadcast %c64_i32 : i32 to vector<4x1xi32>
    %34 = arith.addi %27, %33 : vector<4x1xi32>
    %c-1_i32_8 = arith.constant -1 : i32
    %35 = vector.broadcast %c-1_i32_8 : i32 to vector<4x1xi32>
    %36 = arith.select %32, %34, %35 : vector<4x1xi1>, vector<4x1xi32>
    %37 = vector.broadcast %36 : vector<4x1xi32> to vector<4x128xi32>
    %38 = arith.cmpi eq, %0, %37 : vector<4x128xi32>
    %39 = arith.ori %26, %38 : vector<4x128xi1>
    %40 = vector.extract_strided_slice %1 {offsets = [0, 3], sizes = [4, 1], strides = [1, 1]} : vector<4x4xi32> to vector<4x1xi32>
    %c0_i32_9 = arith.constant 0 : i32
    %41 = vector.broadcast %c0_i32_9 : i32 to vector<4x1xi32>
    %42 = arith.cmpi sge, %40, %41 : vector<4x1xi32>
    %c32_i32_10 = arith.constant 32 : i32
    %43 = vector.broadcast %c32_i32_10 : i32 to vector<4x1xi32>
    %44 = arith.cmpi slt, %40, %43 : vector<4x1xi32>
    %45 = arith.andi %42, %44 : vector<4x1xi1>
    %c96_i32 = arith.constant 96 : i32
    %46 = vector.broadcast %c96_i32 : i32 to vector<4x1xi32>
    %47 = arith.addi %40, %46 : vector<4x1xi32>
    %c-1_i32_11 = arith.constant -1 : i32
    %48 = vector.broadcast %c-1_i32_11 : i32 to vector<4x1xi32>
    %49 = arith.select %45, %47, %48 : vector<4x1xi1>, vector<4x1xi32>
    %50 = vector.broadcast %49 : vector<4x1xi32> to vector<4x128xi32>
    %51 = arith.cmpi eq, %0, %50 : vector<4x128xi32>
    %52 = arith.ori %39, %51 : vector<4x128xi1>
    %53 = arith.extui %52 : vector<4x128xi1> to vector<4x128xi32>
    %54 = arith.sitofp %53 : vector<4x128xi32> to vector<4x128xf32>
    %c0_12 = arith.constant 0 : index
    %c0_13 = arith.constant 0 : index
    %55 = vector.load %arg2[%c0_12, %c0_13] : memref<4x128xf32, #tpu.memory_space<vmem>>, vector<4x128xf32>
    tpu.vector_store %arg2[%c0_12, %c0_13], %54 {strides = array<i32>} : memref<4x128xf32, #tpu.memory_space<vmem>>, vector<4x128xf32>,
    return
  }
  func.func @transform_0(%arg0: i32) -> (i32, i32) {
    %c0_i32 = arith.constant 0 : i32
    %c0_i32_0 = arith.constant 0 : i32
    return %arg0, %c0_i32 : i32, i32
  }
  func.func @transform_1(%arg0: i32) -> (i32, i32) {
    %c0_i32 = arith.constant 0 : i32
    %c0_i32_0 = arith.constant 0 : i32
    return %arg0, %c0_i32 : i32, i32
  }
}

</mosaic_0001>

<llo_original>
// kernel: tpu_custom_call.1
$region0: #{tpu_custom_call.1}
  #allocation0 [shape = 'u32[]', space=smem, size = 0x4, offset = 0x4, fixed_abs, tag = 'smem constant byte address 0x4 - core index']
  #allocation1 [shape = 'u32[144,128]{1,0:T(1,128)}', space=vmem, size = 0x12000, scoped, tag = 'internal scratch']
  %s0 = inlined_call_operand.hbm [shape: s32[4,4], index: 0, kind: input, shape index: {}]
  %s1 = inlined_call_operand.hbm [shape: f32[4,128], index: 1, kind: output, shape index: {}]
  %s2 = sld [smem:[#allocation0]]
  $region18: #{tpu_custom_call.1} parent=0
    _
  %s4 = ssub.s32 1, %s2
  %s5 = scalar_select 0, %s4, %s2
  $region1: #{tpu_custom_call.1} parent=0
    #allocation2 [shape = 'u8[2048]{0}', space=vmem, size = 0x800, scoped, tag = 'input window, operand 0, single buffered']
    #allocation3 [shape = 's32[1]{0}', space=sflag, size = 0x4, scoped, tag = 'scoped memory for tpu_custom_call.1']
    #allocation4 [shape = 's32[1]{0}', space=sflag, size = 0x4, scoped, tag = 'scoped memory for tpu_custom_call.1']
    #allocation5 [shape = 'u8[2048]{0}', space=vmem, size = 0x800, scoped, tag = 'output window, operand 0, single buffered']
    %6 = vsyncpa [#allocation3], 0
    %7 = vsyncpa [#allocation4], 0
    // Predicated region
    $region2: #{tpu_custom_call.1} parent=1 // pred_check
      _
    $region3: #{tpu_custom_call.1} parent=1 // pred_check_branch
      %9 = sbr.rel (0) target = $region5
    $region4: #{tpu_custom_call.1} parent=1 // pred_region
      %s11 = ssub.s32 64, 64
      %12 = vsyncadd [#allocation3], %s11
      %s14 = sshll.u32 [#allocation2], 4
      %s15 = int_to_ptr.vmem [resolvable:$true] %s14
      %17 = dma.hbm_to_vmem [thread:$0]  %s0, 64, %s15, [#allocation3]
    $region5: #{tpu_custom_call.1} parent=1 // pred_fallthru
      _
    // Predicated region
    $region6: #{tpu_custom_call.1} parent=1 // pred_check
      _
    $region7: #{tpu_custom_call.1} parent=1 // pred_check_branch
      %19 = sbr.rel (0) target = $region9
    $region8: #{tpu_custom_call.1} parent=1 // pred_region
      %20 = dma.done [#allocation3], 64
    $region9: #{tpu_custom_call.1} parent=1 // pred_fallthru
      _
    %v21 = vlaneseq
    %v22 = vand.u32 %v21, 127
    %v23 = vld [vmem:[#allocation2] sm:$0xf]
    %vm24 = vcmp.ge.s32.totalorder %v23, 0
    %vm25 = vcmp.lt.s32.totalorder %v23, 32
    %vm26 = vmand %vm24, %vm25
    %v27 = vsel %vm26, %v23, 4294967295
    %28 = vset.pattern.permute.xlu0 0
    %29 = vperm.xlu0 %28, %v27
    %v30 = vpop.permute.xlu0 %29
    %vm31 = vcmp.eq.s32.totalorder %v22, %v30
    %v32 = vadd.s32 %v23, 32
    %v33 = vsel %vm26, %v32, 4294967295
    %34 = vset.pattern.permute.xlu0 1
    %35 = vperm.xlu0 %34, %v33
    %v36 = vpop.permute.xlu0 %35
    %vm37 = vcmp.eq.s32.totalorder %v22, %v36
    %vm38 = vmor %vm31, %vm37
    %v39 = vadd.s32 %v23, 64
    %v40 = vsel %vm26, %v39, 4294967295
    %41 = vset.pattern.permute.xlu0 2
    %42 = vperm.xlu0 %41, %v40
    %v43 = vpop.permute.xlu0 %42
    %vm44 = vcmp.eq.s32.totalorder %v22, %v43
    %vm45 = vmor %vm38, %vm44
    %v46 = vadd.s32 %v23, 96
    %v47 = vsel %vm26, %v46, 4294967295
    %48 = vset.pattern.permute.xlu0 3
    %49 = vperm.xlu0 %48, %v47
    %v50 = vpop.permute.xlu0 %49
    %vm51 = vcmp.eq.s32.totalorder %v22, %v50
    %vm52 = vmor %vm45, %vm51
    %v53 = vsel %vm52, 1, 0
    %v54 = vcvt.s32.f32 %v53
    %55 = vst [vmem:[#allocation5] sm:$0xf] %v54
    // Predicated region
    $region10: #{tpu_custom_call.1} parent=1 // pred_check
      _
    $region11: #{tpu_custom_call.1} parent=1 // pred_check_branch
      %57 = sbr.rel (0) target = $region13
    $region12: #{tpu_custom_call.1} parent=1 // pred_region
      %s59 = ssub.s32 64, 64
      %60 = vsyncadd [#allocation4], %s59
      %s62 = sshll.u32 [#allocation5], 4
      %s63 = int_to_ptr.vmem [resolvable:$true] %s62
      %65 = dma.vmem_to_hbm [thread:$0]  %s63, 64, %s1, [#allocation4]
    $region13: #{tpu_custom_call.1} parent=1 // pred_fallthru
      _
    // Predicated region
    $region14: #{tpu_custom_call.1} parent=1 // pred_check
      _
    $region15: #{tpu_custom_call.1} parent=1 // pred_check_branch
      %67 = sbr.rel (0) target = $region17
    $region16: #{tpu_custom_call.1} parent=1 // pred_region
      %68 = dma.done [#allocation4], 64
    $region17: #{tpu_custom_call.1} parent=1 // pred_fallthru
      _
    %69 = vsyncpa [#allocation3], 1
    %70 = vsyncpa [#allocation4], 1

</llo_original>
